<compile_context>
chip_gen: v5e
topology: v5e:2x2
jax: 0.10.0
libtpu: 0.0.40
codegen_flags: <defaults>
</compile_context>

<pallas_src>
import functools

import jax
import jax.numpy as jnp
import numpy as np
from jax import lax
from jax.experimental import pallas as pl
from jax.experimental.pallas import tpu as pltpu


# ----------------------------------------------------------------------------
# Masked-conv mask construction (matches the standard PixelCNN MaskedConv2d).
# ----------------------------------------------------------------------------
def make_mask(out_c, in_c, k, mask_type="B", data_channels=3):
    mask = np.ones((out_c, in_c, k, k), dtype=np.float32)
    yc, xc = k // 2, k // 2
    mask[:, :, yc, xc + 1:] = 0.0
    mask[:, :, yc + 1:, :] = 0.0
    out_g = np.arange(out_c) % data_channels
    in_g = np.arange(in_c) % data_channels
    if mask_type == "B":
        center = (in_g[None, :] <= out_g[:, None]).astype(np.float32)
    else:  # 'A'
        center = (in_g[None, :] < out_g[:, None]).astype(np.float32)
    mask[:, :, yc, xc] = center
    return mask


# ----------------------------------------------------------------------------
# Pallas kernel: full residual block on one lane-tile (Btile images).
# All tensors are (channels, lanes); lanes = Btile * H * W.
# ----------------------------------------------------------------------------
def _block_kernel(x_ref, mask_ref, w1_ref, b1_ref, w2_ref, b2_ref, w3_ref,
                  b3_ref, o_ref, *, K, W):
    dot_dtype = w1_ref.dtype            # f32, or bf16 on v6e/v7x
    pad = K // 2
    L_tile = x_ref.shape[-1]

    x = x_ref[...]                      # (C2, L_tile) f32; residual kept in f32

    # ---- conv1: 1x1 masked-B on relu(x) ------------------------------------
    y1 = jnp.dot(w1_ref[...], jnp.maximum(x, 0.0).astype(dot_dtype),
                 preferred_element_type=jnp.float32) + b1_ref[...]
    y1 = jnp.maximum(y1, 0.0)           # (hp, L_tile) f32; padded channels stay 0
    y1c = y1.astype(dot_dtype)          # cast ONCE before the tap loop

    # ---- conv2: KxK masked-B with zero padding, as ONE im2col matmul -------
    slabs = []
    t = 0
    for ky in range(K):
        for kx in range(K):
            dy, dx = ky - pad, kx - pad
            # After the roll, lane p holds pixel (y+dy, x+dx) of the SAME image;
            # lanes that crossed an image (or tile-wrap) boundary are zeroed by
            # the precomputed mask, which is exactly the conv's zero padding.
            shift = (-(dy * W + dx)) % L_tile
            s = pltpu.roll(y1c, shift=shift, axis=1) if shift else y1c
            slabs.append(s * mask_ref[pl.ds(t, 1), :])
            t += 1
    # hp is a multiple of the sublane tile -> tile-aligned concatenation.
    patches = jnp.concatenate(slabs, axis=0)          # (K*K*hp, L_tile)
    y2 = jnp.dot(w2_ref[...], patches,
                 preferred_element_type=jnp.float32) + b2_ref[...]
    y2 = jnp.maximum(y2, 0.0)                          # (hp, L_tile) f32

    # ---- conv3: 1x1 masked-B; Dropout2d(p=0) is identity; residual add -----
    y3 = jnp.dot(w3_ref[...], y2.astype(dot_dtype),
                 preferred_element_type=jnp.float32) + b3_ref[...]
    o_ref[...] = (y3 + x).astype(o_ref.dtype)          # lane-dense store


def _native_bf16_vector_units():
    """True only on chips whose VPU/XLU handle bf16 natively (v6e, v7x, ...)."""
    try:
        kind = jax.devices()[0].device_kind.lower()
        return not any(g in kind for g in ("v2", "v3", "v4", "v5"))
    except Exception:
        return False


def drop_masked_residual_block(x_nchw, mw1, b1, mw2, b2, mw3, b3, *, K,
                               compute_dtype=jnp.float32, btile_images=32):
    """x_nchw: (N, 2h, H, W); weights in PyTorch OIHW layout, already masked.
    compute_dtype=bfloat16 feeds bf16 operands to the MXU (f32 accumulation);
    it is automatically downgraded to f32 on chips without a native bf16 VPU."""
    compute_dtype = jnp.dtype(compute_dtype)
    if compute_dtype == jnp.dtype(jnp.bfloat16) and not _native_bf16_vector_units():
        compute_dtype = jnp.dtype(jnp.float32)        # v5e / v4: keep exact f32

    N, C2, H, W = x_nchw.shape
    h = mw1.shape[0]
    pad = K // 2
    L_img = H * W
    itemsize = compute_dtype.itemsize
    sub = 32 // itemsize                 # sublane tile: 8 for f32, 16 for bf16
    hp = ((h + sub - 1) // sub) * sub    # pad hidden channels to a sublane tile

    # ---- lane-tile sizing: many images per grid step, VMEM-budgeted --------
    # Rough per-lane VMEM bytes: im2col slab (x2 for concat), y1/y2/y3,
    # double-buffered in/out blocks and the invariant per-tap mask.
    bytes_per_lane = (2 * K * K * hp * itemsize + hp * (8 + 2 * itemsize)
                      + C2 * (4 + 16) + 2 * K * K * itemsize)
    max_lanes = max(L_img, (24 << 20) // bytes_per_lane)   # stay well under v7x VMEM
    Btile = max(1, min(btile_images, N, max_lanes // L_img))
    if (Btile * L_img) % 128 != 0:
        Btile = N                        # single grid step; full lane extent is OK
    Np = ((N + Btile - 1) // Btile) * Btile
    L_TILE = Btile * L_img

    # ---- weight packing (glue, outside the kernel) --------------------------
    # 1x1 convs become (out, in) matrices; conv2 becomes the im2col matrix
    # (hp, K*K*hp) whose column block t = ky*K+kx holds w2[:, :, ky, kx].
    w1m = jnp.zeros((hp, C2), jnp.float32).at[:h, :].set(mw1[:, :, 0, 0])
    b1m = jnp.zeros((hp, 1), jnp.float32).at[:h, 0].set(b1)
    w2_khh = jnp.transpose(mw2, (2, 3, 0, 1))                     # (K,K,out,in)
    w2_pad = jnp.zeros((K, K, hp, hp), jnp.float32).at[:, :, :h, :h].set(w2_khh)
    w2m = jnp.transpose(w2_pad, (2, 0, 1, 3)).reshape(hp, K * K * hp)
    b2m = jnp.zeros((hp, 1), jnp.float32).at[:h, 0].set(b2)
    w3m = jnp.zeros((C2, hp), jnp.float32).at[:, :h].set(mw3[:, :, 0, 0])
    b3m = b3.reshape(C2, 1).astype(jnp.float32)
    w1m, w2m, w3m = (w.astype(compute_dtype) for w in (w1m, w2m, w3m))

    # ---- precomputed per-tap boundary masks (grid-invariant input) ---------
    yy, xx = np.meshgrid(np.arange(H), np.arange(W), indexing="ij")
    yy = yy.reshape(-1)
    xx = xx.reshape(-1)
    taps = []
    for ky in range(K):
        for kx in range(K):
            dy, dx = ky - pad, kx - pad
            taps.append(((yy + dy >= 0) & (yy + dy < H) &
                         (xx + dx >= 0) & (xx + dx < W)).astype(np.float32))
    mask_tile = jnp.asarray(np.tile(np.stack(taps, 0), (1, Btile)), compute_dtype)

    # ---- layout: (C2, Np*H*W), images consecutive along the lane axis ------
    if Np != N:
        x_nchw = jnp.pad(x_nchw, ((0, Np - N), (0, 0), (0, 0), (0, 0)))
    x_flat = x_nchw.reshape(Np, C2, L_img).transpose(1, 0, 2).reshape(C2, Np * L_img)

    kernel = functools.partial(_block_kernel, K=K, W=W)
    const = lambda a: pl.BlockSpec(a.shape, lambda i, _nd=a.ndim: (0,) * _nd)

    out = pl.pallas_call(
        kernel,
        out_shape=jax.ShapeDtypeStruct((C2, Np * L_img), x_nchw.dtype),
        grid_spec=pltpu.PrefetchScalarGridSpec(
            num_scalar_prefetch=0,
            grid=(Np // Btile,),                       # lane-tiles of Btile images
            in_specs=[
                pl.BlockSpec((C2, L_TILE), lambda i: (0, i)),
                const(mask_tile),
                const(w1m), const(b1m),
                const(w2m), const(b2m),
                const(w3m), const(b3m),
            ],
            out_specs=pl.BlockSpec((C2, L_TILE), lambda i: (0, i)),
        ),
        compiler_params=pltpu.CompilerParams(
            dimension_semantics=("parallel",)),        # megacore / v7x 2-TC split
    )(x_flat, mask_tile, w1m, b1m, w2m, b2m, w3m, b3m)

    out = out.reshape(C2, Np, L_img).transpose(1, 0, 2).reshape(Np, C2, H, W)
    return out[:N]


# ----------------------------------------------------------------------------
# Pure-JAX reference (NCHW, like the PyTorch module), for correctness checking.
# ----------------------------------------------------------------------------
def _conv_ref(x, w_oihw, b, pad):
    y = lax.conv_general_dilated(
        x, w_oihw, window_strides=(1, 1),
        padding=[(pad, pad), (pad, pad)],
        dimension_numbers=("NCHW", "OIHW", "NCHW"))
    return y + b.reshape(1, -1, 1, 1)


def _block_ref(x, mw1, b1, mw2, b2, mw3, b3, K):
    y = _conv_ref(jax.nn.relu(x), mw1, b1, 0)
    y = _conv_ref(jax.nn.relu(y), mw2, b2, K // 2)
    y = _conv_ref(jax.nn.relu(y), mw3, b3, 0)
    return y + x   # Dropout2d(p=0.0) is identity


# ----------------------------------------------------------------------------
if __name__ == "__main__":
    # Module hyper-parameters (small, consistent with the forward pass).
    h = 6                 # hidden width -> block input/output channels = 2h = 12
    data_channels = 3
    K = 3                 # conv2 kernel size
    N, H, W = 4, 16, 16
    C2 = 2 * h

    key = jax.random.PRNGKey(0)
    k_x, k1, k1b, k2, k2b, k3, k3b = jax.random.split(key, 7)

    def init_w(k, out_c, in_c, ks):
        bound = 1.0 / np.sqrt(in_c * ks * ks)
        return jax.random.uniform(k, (out_c, in_c, ks, ks), jnp.float32, -bound, bound)

    def init_b(k, out_c, in_c, ks):
        bound = 1.0 / np.sqrt(in_c * ks * ks)
        return jax.random.uniform(k, (out_c,), jnp.float32, -bound, bound)

    w1 = init_w(k1, h, C2, 1);   b1 = init_b(k1b, h, C2, 1)
    w2 = init_w(k2, h, h, K);    b2 = init_b(k2b, h, h, K)
    w3 = init_w(k3, C2, h, 1);   b3 = init_b(k3b, C2, h, 1)

    # Apply 'B'-type masks to the weights (glue, outside the kernel).
    mw1 = w1 * jnp.asarray(make_mask(h, C2, 1, "B", data_channels))
    mw2 = w2 * jnp.asarray(make_mask(h, h, K, "B", data_channels))
    mw3 = w3 * jnp.asarray(make_mask(C2, h, 1, "B", data_channels))

    # Input in the module's native NCHW layout.
    x = jax.random.normal(k_x, (N, C2, H, W), jnp.float32)

    ref = _block_ref(x, mw1, b1, mw2, b2, mw3, b3, K)

    # f32 MXU operands (exact path); btile_images=2 -> grid of 2 lane-tiles,
    # exercising the batched-lane path with >1 grid step.
    out = drop_masked_residual_block(x, mw1, b1, mw2, b2, mw3, b3, K=K,
                                     btile_images=2)
    out = jax.block_until_ready(out)
    np.testing.assert_allclose(np.asarray(out), np.asarray(ref), rtol=1e-4, atol=1e-4)

    # bf16 MXU operands with f32 accumulation (v6e / v7x); the wrapper silently
    # falls back to exact f32 on v5e and earlier, so this check is always valid.
    out_bf16 = drop_masked_residual_block(x, mw1, b1, mw2, b2, mw3, b3, K=K,
                                          compute_dtype=jnp.bfloat16,
                                          btile_images=2)
    out_bf16 = jax.block_until_ready(out_bf16)
    np.testing.assert_allclose(np.asarray(out_bf16), np.asarray(ref),
                               rtol=5e-2, atol=5e-2)

    print("KERNEL_OK")
</pallas_src>

<mosaic_0001>
module attributes {stable_mosaic.version = 11 : i64} {
  func.func @_block_kernel(%arg0: i32, %arg1: memref<12x512xf32, #tpu.memory_space<vmem>>, %arg2: memref<9x512xf32, #tpu.memory_space<vmem>>, %arg3: memref<8x12xf32, #tpu.memory_space<vmem>>, %arg4: memref<8x1xf32, #tpu.memory_space<vmem>>, %arg5: memref<8x72xf32, #tpu.memory_space<vmem>>, %arg6: memref<8x1xf32, #tpu.memory_space<vmem>>, %arg7: memref<12x8xf32, #tpu.memory_space<vmem>>, %arg8: memref<12x1xf32, #tpu.memory_space<vmem>>, %arg9: memref<12x512xf32, #tpu.memory_space<vmem>>) attributes {dimension_semantics = [#tpu.dimension_semantics<parallel>], iteration_bounds = array<i64: 2>, scalar_prefetch = 0 : i64, scratch_operands = 0 : i64, tpu.core_type = #tpu.core_type<tc>, window_params = [{transform_indices = @transform_0, window_bounds = array<i64: 12, 512>}, {pipeline_mode = #tpu.pipeline_mode<synchronous>, transform_indices = @transform_1, window_bounds = array<i64: 9, 512>}, {pipeline_mode = #tpu.pipeline_mode<synchronous>, transform_indices = @transform_2, window_bounds = array<i64: 8, 12>}, {pipeline_mode = #tpu.pipeline_mode<synchronous>, transform_indices = @transform_3, window_bounds = array<i64: 8, 1>}, {pipeline_mode = #tpu.pipeline_mode<synchronous>, transform_indices = @transform_4, window_bounds = array<i64: 8, 72>}, {pipeline_mode = #tpu.pipeline_mode<synchronous>, transform_indices = @transform_5, window_bounds = array<i64: 8, 1>}, {pipeline_mode = #tpu.pipeline_mode<synchronous>, transform_indices = @transform_6, window_bounds = array<i64: 12, 8>}, {pipeline_mode = #tpu.pipeline_mode<synchronous>, transform_indices = @transform_7, window_bounds = array<i64: 12, 1>}, {transform_indices = @transform_8, window_bounds = array<i64: 12, 512>}]} {
    %c0 = arith.constant 0 : index
    %c0_0 = arith.constant 0 : index
    %0 = vector.load %arg1[%c0, %c0_0] : memref<12x512xf32, #tpu.memory_space<vmem>>, vector<12x512xf32>
    %c0_1 = arith.constant 0 : index
    %c0_2 = arith.constant 0 : index
    %1 = vector.load %arg3[%c0_1, %c0_2] : memref<8x12xf32, #tpu.memory_space<vmem>>, vector<8x12xf32>
    %cst = arith.constant 0.000000e+00 : f32
    %2 = vector.broadcast %cst : f32 to vector<12x512xf32>
    %3 = arith.maximumf %0, %2 : vector<12x512xf32>
    %cst_3 = arith.constant dense<0.000000e+00> : vector<8x512xf32>
    %4 = tpu.matmul %1, %3, %cst_3 {dimension_numbers = #tpu.dot_dimension_numbers<[1], [0], [0], [1], [0, 0, 1, 1], [], []>} : vector<8x12xf32>, vector<12x512xf32>, vector<8x512xf32> -> vector<8x512xf32>
    %c0_4 = arith.constant 0 : index
    %c0_5 = arith.constant 0 : index
    %5 = vector.load %arg4[%c0_4, %c0_5] : memref<8x1xf32, #tpu.memory_space<vmem>>, vector<8x1xf32>
    %6 = vector.broadcast %5 : vector<8x1xf32> to vector<8x512xf32>
    %7 = arith.addf %4, %6 : vector<8x512xf32>
    %cst_6 = arith.constant 0.000000e+00 : f32
    %8 = vector.broadcast %cst_6 : f32 to vector<8x512xf32>
    %9 = arith.maximumf %7, %8 : vector<8x512xf32>
    %c17_i32 = arith.constant 17 : i32
    %10 = tpu.dynamic_rotate %9 by %c17_i32 dim 1 : vector<8x512xf32>, i32 -> vector<8x512xf32>
    %c0_7 = arith.constant 0 : index
    %c0_8 = arith.constant 0 : index
    %11 = vector.load %arg2[%c0_7, %c0_8] : memref<9x512xf32, #tpu.memory_space<vmem>>, vector<1x512xf32>
    %12 = vector.broadcast %11 : vector<1x512xf32> to vector<8x512xf32>
    %13 = arith.mulf %10, %12 : vector<8x512xf32>
    %c16_i32 = arith.constant 16 : i32
    %14 = tpu.dynamic_rotate %9 by %c16_i32 dim 1 : vector<8x512xf32>, i32 -> vector<8x512xf32>
    %c1 = arith.constant 1 : index
    %c0_9 = arith.constant 0 : index
    %15 = vector.load %arg2[%c1, %c0_9] : memref<9x512xf32, #tpu.memory_space<vmem>>, vector<1x512xf32>
    %16 = vector.broadcast %15 : vector<1x512xf32> to vector<8x512xf32>
    %17 = arith.mulf %14, %16 : vector<8x512xf32>
    %c15_i32 = arith.constant 15 : i32
    %18 = tpu.dynamic_rotate %9 by %c15_i32 dim 1 : vector<8x512xf32>, i32 -> vector<8x512xf32>
    %c2 = arith.constant 2 : index
    %c0_10 = arith.constant 0 : index
    %19 = vector.load %arg2[%c2, %c0_10] : memref<9x512xf32, #tpu.memory_space<vmem>>, vector<1x512xf32>
    %20 = vector.broadcast %19 : vector<1x512xf32> to vector<8x512xf32>
    %21 = arith.mulf %18, %20 : vector<8x512xf32>
    %c1_i32 = arith.constant 1 : i32
    %22 = tpu.dynamic_rotate %9 by %c1_i32 dim 1 : vector<8x512xf32>, i32 -> vector<8x512xf32>
    %c3 = arith.constant 3 : index
    %c0_11 = arith.constant 0 : index
    %23 = vector.load %arg2[%c3, %c0_11] : memref<9x512xf32, #tpu.memory_space<vmem>>, vector<1x512xf32>
    %24 = vector.broadcast %23 : vector<1x512xf32> to vector<8x512xf32>
    %25 = arith.mulf %22, %24 : vector<8x512xf32>
    %c4 = arith.constant 4 : index
    %c0_12 = arith.constant 0 : index
    %26 = vector.load %arg2[%c4, %c0_12] : memref<9x512xf32, #tpu.memory_space<vmem>>, vector<1x512xf32>
    %27 = vector.broadcast %26 : vector<1x512xf32> to vector<8x512xf32>
    %28 = arith.mulf %9, %27 : vector<8x512xf32>
    %c511_i32 = arith.constant 511 : i32
    %29 = tpu.dynamic_rotate %9 by %c511_i32 dim 1 : vector<8x512xf32>, i32 -> vector<8x512xf32>
    %c5 = arith.constant 5 : index
    %c0_13 = arith.constant 0 : index
    %30 = vector.load %arg2[%c5, %c0_13] : memref<9x512xf32, #tpu.memory_space<vmem>>, vector<1x512xf32>
    %31 = vector.broadcast %30 : vector<1x512xf32> to vector<8x512xf32>
    %32 = arith.mulf %29, %31 : vector<8x512xf32>
    %c497_i32 = arith.constant 497 : i32
    %33 = tpu.dynamic_rotate %9 by %c497_i32 dim 1 : vector<8x512xf32>, i32 -> vector<8x512xf32>
    %c6 = arith.constant 6 : index
    %c0_14 = arith.constant 0 : index
    %34 = vector.load %arg2[%c6, %c0_14] : memref<9x512xf32, #tpu.memory_space<vmem>>, vector<1x512xf32>
    %35 = vector.broadcast %34 : vector<1x512xf32> to vector<8x512xf32>
    %36 = arith.mulf %33, %35 : vector<8x512xf32>
    %c496_i32 = arith.constant 496 : i32
    %37 = tpu.dynamic_rotate %9 by %c496_i32 dim 1 : vector<8x512xf32>, i32 -> vector<8x512xf32>
    %c7 = arith.constant 7 : index
    %c0_15 = arith.constant 0 : index
    %38 = vector.load %arg2[%c7, %c0_15] : memref<9x512xf32, #tpu.memory_space<vmem>>, vector<1x512xf32>
    %39 = vector.broadcast %38 : vector<1x512xf32> to vector<8x512xf32>
    %40 = arith.mulf %37, %39 : vector<8x512xf32>
    %c495_i32 = arith.constant 495 : i32
    %41 = tpu.dynamic_rotate %9 by %c495_i32 dim 1 : vector<8x512xf32>, i32 -> vector<8x512xf32>
    %c8 = arith.constant 8 : index
    %c0_16 = arith.constant 0 : index
    %42 = vector.load %arg2[%c8, %c0_16] : memref<9x512xf32, #tpu.memory_space<vmem>>, vector<1x512xf32>
    %43 = vector.broadcast %42 : vector<1x512xf32> to vector<8x512xf32>
    %44 = arith.mulf %41, %43 : vector<8x512xf32>
    %45 = tpu.concatenate %13, %17, %21, %25, %28, %32, %36, %40, %44 in 0 : vector<8x512xf32>, vector<8x512xf32>, vector<8x512xf32>, vector<8x512xf32>, vector<8x512xf32>, vector<8x512xf32>, vector<8x512xf32>, vector<8x512xf32>, vector<8x512xf32> -> vector<72x512xf32>
    %c0_17 = arith.constant 0 : index
    %c0_18 = arith.constant 0 : index
    %46 = vector.load %arg5[%c0_17, %c0_18] : memref<8x72xf32, #tpu.memory_space<vmem>>, vector<8x72xf32>
    %cst_19 = arith.constant dense<0.000000e+00> : vector<8x512xf32>
    %47 = tpu.matmul %46, %45, %cst_19 {dimension_numbers = #tpu.dot_dimension_numbers<[1], [0], [0], [1], [0, 0, 1, 1], [], []>} : vector<8x72xf32>, vector<72x512xf32>, vector<8x512xf32> -> vector<8x512xf32>
    %c0_20 = arith.constant 0 : index
    %c0_21 = arith.constant 0 : index
    %48 = vector.load %arg6[%c0_20, %c0_21] : memref<8x1xf32, #tpu.memory_space<vmem>>, vector<8x1xf32>
    %49 = vector.broadcast %48 : vector<8x1xf32> to vector<8x512xf32>
    %50 = arith.addf %47, %49 : vector<8x512xf32>
    %cst_22 = arith.constant 0.000000e+00 : f32
    %51 = vector.broadcast %cst_22 : f32 to vector<8x512xf32>
    %52 = arith.maximumf %50, %51 : vector<8x512xf32>
    %c0_23 = arith.constant 0 : index
    %c0_24 = arith.constant 0 : index
    %53 = vector.load %arg7[%c0_23, %c0_24] : memref<12x8xf32, #tpu.memory_space<vmem>>, vector<12x8xf32>
    %cst_25 = arith.constant dense<0.000000e+00> : vector<12x512xf32>
    %54 = tpu.matmul %53, %52, %cst_25 {dimension_numbers = #tpu.dot_dimension_numbers<[1], [0], [0], [1], [0, 0, 1, 1], [], []>} : vector<12x8xf32>, vector<8x512xf32>, vector<12x512xf32> -> vector<12x512xf32>
    %c0_26 = arith.constant 0 : index
    %c0_27 = arith.constant 0 : index
    %55 = vector.load %arg8[%c0_26, %c0_27] : memref<12x1xf32, #tpu.memory_space<vmem>>, vector<12x1xf32>
    %56 = vector.broadcast %55 : vector<12x1xf32> to vector<12x512xf32>
    %57 = arith.addf %54, %56 : vector<12x512xf32>
    %58 = arith.addf %57, %0 : vector<12x512xf32>
    %c0_28 = arith.constant 0 : index
    %c0_29 = arith.constant 0 : index
    %59 = vector.load %arg9[%c0_28, %c0_29] : memref<12x512xf32, #tpu.memory_space<vmem>>, vector<12x512xf32>
    tpu.vector_store %arg9[%c0_28, %c0_29], %58 {strides = array<i32>} : memref<12x512xf32, #tpu.memory_space<vmem>>, vector<12x512xf32>,
    return
  }
  func.func @transform_0(%arg0: i32) -> (i32, i32) {
    %c0_i32 = arith.constant 0 : i32
    %c0_i32_0 = arith.constant 0 : i32
    return %c0_i32, %arg0 : i32, i32
  }
  func.func @transform_1(%arg0: i32) -> (i32, i32) {
    %c0_i32 = arith.constant 0 : i32
    %c0_i32_0 = arith.constant 0 : i32
    %c0_i32_1 = arith.constant 0 : i32
    return %c0_i32, %c0_i32_0 : i32, i32
  }
  func.func @transform_2(%arg0: i32) -> (i32, i32) {
    %c0_i32 = arith.constant 0 : i32
    %c0_i32_0 = arith.constant 0 : i32
    %c0_i32_1 = arith.constant 0 : i32
    return %c0_i32, %c0_i32_0 : i32, i32
  }
  func.func @transform_3(%arg0: i32) -> (i32, i32) {
    %c0_i32 = arith.constant 0 : i32
    %c0_i32_0 = arith.constant 0 : i32
    %c0_i32_1 = arith.constant 0 : i32
    return %c0_i32, %c0_i32_0 : i32, i32
  }
  func.func @transform_4(%arg0: i32) -> (i32, i32) {
    %c0_i32 = arith.constant 0 : i32
    %c0_i32_0 = arith.constant 0 : i32
    %c0_i32_1 = arith.constant 0 : i32
    return %c0_i32, %c0_i32_0 : i32, i32
  }
  func.func @transform_5(%arg0: i32) -> (i32, i32) {
    %c0_i32 = arith.constant 0 : i32
    %c0_i32_0 = arith.constant 0 : i32
    %c0_i32_1 = arith.constant 0 : i32
    return %c0_i32, %c0_i32_0 : i32, i32
  }
  func.func @transform_6(%arg0: i32) -> (i32, i32) {
    %c0_i32 = arith.constant 0 : i32
    %c0_i32_0 = arith.constant 0 : i32
    %c0_i32_1 = arith.constant 0 : i32
    return %c0_i32, %c0_i32_0 : i32, i32
  }
  func.func @transform_7(%arg0: i32) -> (i32, i32) {
    %c0_i32 = arith.constant 0 : i32
    %c0_i32_0 = arith.constant 0 : i32
    %c0_i32_1 = arith.constant 0 : i32
    return %c0_i32, %c0_i32_0 : i32, i32
  }
  func.func @transform_8(%arg0: i32) -> (i32, i32) {
    %c0_i32 = arith.constant 0 : i32
    %c0_i32_0 = arith.constant 0 : i32
    return %c0_i32, %arg0 : i32, i32
  }
}

</mosaic_0001>

<llo_original>
// kernel: tpu_custom_call.1
$region0: #{tpu_custom_call.1}
  #allocation0 [shape = 'u32[]', space=smem, size = 0x4, offset = 0x4, fixed_abs, tag = 'smem constant byte address 0x4 - core index']
  #allocation1 [shape = 'u32[72,128]{1,0:T(1,128)}', space=vmem, size = 0x9000, scoped, tag = 'internal scratch']
  %s0 = inlined_call_operand.hbm [shape: f32[12,1024], index: 0, kind: input, shape index: {}]
  %s1 = inlined_call_operand.hbm [shape: f32[9,512], index: 1, kind: input, shape index: {}]
  %s2 = inlined_call_operand.vmem [shape: f32[8,12], index: 2, kind: input, shape index: {}]
  %s3 = inlined_call_operand.vmem [shape: f32[8,1], index: 3, kind: input, shape index: {}]
  %s4 = inlined_call_operand.vmem [shape: f32[8,72], index: 4, kind: input, shape index: {}]
  %s5 = inlined_call_operand.vmem [shape: f32[8,1], index: 5, kind: input, shape index: {}]
  %s6 = inlined_call_operand.vmem [shape: f32[12,8], index: 6, kind: input, shape index: {}]
  %s7 = inlined_call_operand.vmem [shape: f32[12,1], index: 7, kind: input, shape index: {}]
  %s8 = inlined_call_operand.hbm [shape: f32[12,1024], index: 8, kind: output, shape index: {}]
  %s9 = sld [smem:[#allocation0]]
  $region73: #{tpu_custom_call.1} parent=0
    _
  %s11 = ssub.s32 1, %s9
  %s12 = scalar_select 0, %s11, %s9
  $region1: #{tpu_custom_call.1} parent=0
    #allocation2 [shape = 'u8[65536]{0}', space=vmem, size = 0x10000, scoped, tag = 'input window, operand 0']
    #allocation3 [shape = 's32[2]{0}', space=sflag, size = 0x8, scoped, tag = 'scoped memory for tpu_custom_call.1']
    #allocation4 [shape = 's32[2]{0}', space=sflag, size = 0x8, scoped, tag = 'scoped memory for tpu_custom_call.1']
    #allocation5 [shape = 'u8[32768]{0}', space=vmem, size = 0x8000, scoped, tag = 'input window, operand 1, single buffered']
    #allocation6 [shape = 's32[1]{0}', space=sflag, size = 0x4, scoped, tag = 'scoped memory for tpu_custom_call.1']
    #allocation7 [shape = 'u8[65536]{0}', space=vmem, size = 0x10000, scoped, tag = 'output window, operand 0']
    %13 = vsyncpa [#allocation3], 0
    %s14 = scalar_lea.sflag [#allocation3], 1
    %15 = vsyncpa %s14, 0
    %16 = vsyncpa [#allocation6], 0
    %17 = vsyncpa [#allocation4], 0
    %s18 = scalar_lea.sflag [#allocation4], 1
    %19 = vsyncpa %s18, 0
    loop: start=0, step=1, limit=4
    $region2: #{tpu_custom_call.1} parent=1 // loop_pre_header
      _
    $region3: #{tpu_custom_call.1} parent=1 // loop_header
      %s21 = sphi 0, %s25
      %p22 = scmp.ge.s32.totalorder %s21, 4
      %s31 = sphi 0, %s33
      %s34 = sphi 0, %s31
      %s35 = sphi 0, %s34
      %s51 = sphi 0, %s35
      %s55 = sphi 0, %s55
      %s57 = sphi 0, %s55
      %s58 = sphi 0, %s57
      %s72 = sphi 0, %s58
      %s76 = sphi 0, %s76
      %s78 = sphi 0, %s76
      %s79 = sphi 0, %s78
      %s93 = sphi 0, %s79
      %s97 = sphi 0, %s97
      %s99 = sphi 0, %s97
      %s100 = sphi 0, %s99
      %s114 = sphi 0, %s100
      %s118 = sphi 0, %s118
      %s120 = sphi 0, %s118
      %s121 = sphi 0, %s120
      %s135 = sphi 0, %s121
      %s139 = sphi 0, %s139
      %s141 = sphi 0, %s139
      %s142 = sphi 0, %s141
      %s156 = sphi 0, %s142
      %s160 = sphi 0, %s160
      %s162 = sphi 0, %s160
      %s163 = sphi 0, %s162
      %s177 = sphi 0, %s163
      %s181 = sphi 0, %s181
      %s183 = sphi 0, %s181
      %s184 = sphi 0, %s183
      %s198 = sphi 0, %s184
      %s204 = sphi 0, %s206
      %s207 = sphi 0, %s204
      %s208 = sphi 0, %s207
      %s224 = sphi 0, %s208
    $region4: #{tpu_custom_call.1} parent=1 // loop_header_branch
      %24 = sbr.rel (%p22) target = $region8
    $region5: #{tpu_custom_call.1} parent=1 // loop_body
      %s26 = ssub.s32 %s21, 1
      %s27 = ssub.s32 %s21, 2
      %s28 = sadd.s32 %s21, 1
      %s29 = ssub.s32 %s21, %s28
      %p30 = scmp.eq.s32.totalorder %s29, 0
      %s32 = sadd.s32 %s31, 1
      %s33 = scalar_select %p30, %s31, %s32
      %p36 = pneg %p30
      %p37 = scmp.eq.s32.totalorder %s21, 1
      %p38 = por %p36, %p37
      %p39 = scmp.ne.s32.totalorder %s31, %s34
      %p40 = scmp.eq.s32.totalorder %s21, 0
      %p41 = por %p39, %p40
      %p42 = scmp.ne.s32.totalorder %s31, %s34
      %p43 = scmp.eq.s32.totalorder %s26, 1
      %p44 = por %p42, %p43
      %p45 = scmp.ne.s32.totalorder %s34, %s35
      %p46 = scmp.eq.s32.totalorder %s26, 0
      %p47 = por %p45, %p46
      %p48 = scmp.ne.s32.totalorder %s34, %s35
      %p49 = scmp.eq.s32.totalorder %s27, 1
      %p50 = por %p48, %p49
      %p52 = scmp.ne.s32.totalorder %s35, %s51
      %p53 = scmp.eq.s32.totalorder %s27, 0
      %p54 = por %p52, %p53
      %s56 = sadd.s32 %s55, 1
      %p59 = scmp.eq.s32.totalorder %s21, 1
      %p60 = scmp.ne.s32.totalorder %s55, %s57
      %p61 = scmp.eq.s32.totalorder %s21, 0
      %p62 = por %p60, %p61
      %p63 = scmp.ne.s32.totalorder %s55, %s57
      %p64 = scmp.eq.s32.totalorder %s26, 1
      %p65 = por %p63, %p64
      %p66 = scmp.ne.s32.totalorder %s57, %s58
      %p67 = scmp.eq.s32.totalorder %s26, 0
      %p68 = por %p66, %p67
      %p69 = scmp.ne.s32.totalorder %s57, %s58
      %p70 = scmp.eq.s32.totalorder %s27, 1
      %p71 = por %p69, %p70
      %p73 = scmp.ne.s32.totalorder %s58, %s72
      %p74 = scmp.eq.s32.totalorder %s27, 0
      %p75 = por %p73, %p74
      %s77 = sadd.s32 %s76, 1
      %p80 = scmp.eq.s32.totalorder %s21, 1
      %p81 = scmp.ne.s32.totalorder %s76, %s78
      %p82 = scmp.eq.s32.totalorder %s21, 0
      %p83 = por %p81, %p82
      %p84 = scmp.ne.s32.totalorder %s76, %s78
      %p85 = scmp.eq.s32.totalorder %s26, 1
      %p86 = por %p84, %p85
      %p87 = scmp.ne.s32.totalorder %s78, %s79
      %p88 = scmp.eq.s32.totalorder %s26, 0
      %p89 = por %p87, %p88
      %p90 = scmp.ne.s32.totalorder %s78, %s79
      %p91 = scmp.eq.s32.totalorder %s27, 1
      %p92 = por %p90, %p91
      %p94 = scmp.ne.s32.totalorder %s79, %s93
      %p95 = scmp.eq.s32.totalorder %s27, 0
      %p96 = por %p94, %p95
      %s98 = sadd.s32 %s97, 1
      %p101 = scmp.eq.s32.totalorder %s21, 1
      %p102 = scmp.ne.s32.totalorder %s97, %s99
      %p103 = scmp.eq.s32.totalorder %s21, 0
      %p104 = por %p102, %p103
      %p105 = scmp.ne.s32.totalorder %s97, %s99
      %p106 = scmp.eq.s32.totalorder %s26, 1
      %p107 = por %p105, %p106
      %p108 = scmp.ne.s32.totalorder %s99, %s100
      %p109 = scmp.eq.s32.totalorder %s26, 0
      %p110 = por %p108, %p109
      %p111 = scmp.ne.s32.totalorder %s99, %s100
      %p112 = scmp.eq.s32.totalorder %s27, 1
      %p113 = por %p111, %p112
      %p115 = scmp.ne.s32.totalorder %s100, %s114
      %p116 = scmp.eq.s32.totalorder %s27, 0
      %p117 = por %p115, %p116
      %s119 = sadd.s32 %s118, 1
      %p122 = scmp.eq.s32.totalorder %s21, 1
      %p123 = scmp.ne.s32.totalorder %s118, %s120
      %p124 = scmp.eq.s32.totalorder %s21, 0
      %p125 = por %p123, %p124
      %p126 = scmp.ne.s32.totalorder %s118, %s120
      %p127 = scmp.eq.s32.totalorder %s26, 1
      %p128 = por %p126, %p127
      %p129 = scmp.ne.s32.totalorder %s120, %s121
      %p130 = scmp.eq.s32.totalorder %s26, 0
      %p131 = por %p129, %p130
      %p132 = scmp.ne.s32.totalorder %s120, %s121
      %p133 = scmp.eq.s32.totalorder %s27, 1
      %p134 = por %p132, %p133
      %p136 = scmp.ne.s32.totalorder %s121, %s135
      %p137 = scmp.eq.s32.totalorder %s27, 0
      %p138 = por %p136, %p137
      %s140 = sadd.s32 %s139, 1
      %p143 = scmp.eq.s32.totalorder %s21, 1
      %p144 = scmp.ne.s32.totalorder %s139, %s141
      %p145 = scmp.eq.s32.totalorder %s21, 0
      %p146 = por %p144, %p145
      %p147 = scmp.ne.s32.totalorder %s139, %s141
      %p148 = scmp.eq.s32.totalorder %s26, 1
      %p149 = por %p147, %p148
      %p150 = scmp.ne.s32.totalorder %s141, %s142
      %p151 = scmp.eq.s32.totalorder %s26, 0
      %p152 = por %p150, %p151
      %p153 = scmp.ne.s32.totalorder %s141, %s142
      %p154 = scmp.eq.s32.totalorder %s27, 1
      %p155 = por %p153, %p154
      %p157 = scmp.ne.s32.totalorder %s142, %s156
      %p158 = scmp.eq.s32.totalorder %s27, 0
      %p159 = por %p157, %p158
      %s161 = sadd.s32 %s160, 1
      %p164 = scmp.eq.s32.totalorder %s21, 1
      %p165 = scmp.ne.s32.totalorder %s160, %s162
      %p166 = scmp.eq.s32.totalorder %s21, 0
      %p167 = por %p165, %p166
      %p168 = scmp.ne.s32.totalorder %s160, %s162
      %p169 = scmp.eq.s32.totalorder %s26, 1
      %p170 = por %p168, %p169
      %p171 = scmp.ne.s32.totalorder %s162, %s163
      %p172 = scmp.eq.s32.totalorder %s26, 0
      %p173 = por %p171, %p172
      %p174 = scmp.ne.s32.totalorder %s162, %s163
      %p175 = scmp.eq.s32.totalorder %s27, 1
      %p176 = por %p174, %p175
      %p178 = scmp.ne.s32.totalorder %s163, %s177
      %p179 = scmp.eq.s32.totalorder %s27, 0
      %p180 = por %p178, %p179
      %s182 = sadd.s32 %s181, 1
      %p185 = scmp.eq.s32.totalorder %s21, 1
      %p186 = scmp.ne.s32.totalorder %s181, %s183
      %p187 = scmp.eq.s32.totalorder %s21, 0
      %p188 = por %p186, %p187
      %p189 = scmp.ne.s32.totalorder %s181, %s183
      %p190 = scmp.eq.s32.totalorder %s26, 1
      %p191 = por %p189, %p190
      %p192 = scmp.ne.s32.totalorder %s183, %s184
      %p193 = scmp.eq.s32.totalorder %s26, 0
      %p194 = por %p192, %p193
      %p195 = scmp.ne.s32.totalorder %s183, %s184
      %p196 = scmp.eq.s32.totalorder %s27, 1
      %p197 = por %p195, %p196
      %p199 = scmp.ne.s32.totalorder %s184, %s198
      %p200 = scmp.eq.s32.totalorder %s27, 0
      %p201 = por %p199, %p200
      %s202 = ssub.s32 %s21, %s28
      %p203 = scmp.eq.s32.totalorder %s202, 0
      %s205 = sadd.s32 %s204, 1
      %s206 = scalar_select %p203, %s204, %s205
      %p209 = pneg %p203
      %p210 = scmp.eq.s32.totalorder %s21, 1
      %p211 = por %p209, %p210
      %p212 = scmp.ne.s32.totalorder %s204, %s207
      %p213 = scmp.eq.s32.totalorder %s21, 0
      %p214 = por %p212, %p213
      %p215 = scmp.ne.s32.totalorder %s204, %s207
      %p216 = scmp.eq.s32.totalorder %s26, 1
      %p217 = por %p215, %p216
      %p218 = scmp.ne.s32.totalorder %s207, %s208
      %p219 = scmp.eq.s32.totalorder %s26, 0
      %p220 = por %p218, %p219
      %p221 = scmp.ne.s32.totalorder %s207, %s208
      %p222 = scmp.eq.s32.totalorder %s27, 1
      %p223 = por %p221, %p222
      %p225 = scmp.ne.s32.totalorder %s208, %s224
      %p226 = scmp.eq.s32.totalorder %s27, 0
      %p227 = por %p225, %p226
      %p228 = scmp.le.s32.totalorder 1, %s21
      %p229 = scmp.lt.s32.totalorder %s21, 3
      %p230 = pnand %p228, %p229
      %p231 = pneg %p230
      // Predicated region
      $region9: #{tpu_custom_call.1} parent=5 // pred_check
        _
      $region10: #{tpu_custom_call.1} parent=5 // pred_check_branch
        %233 = sbr.rel (%p230) target = $region12
      $region11: #{tpu_custom_call.1} parent=5 // pred_region
        %s234 = ssub.s32 %s21, 1
        // Predicated region
        $region13: #{tpu_custom_call.1} parent=11 // pred_check
          %p235 = pneg %p68
        $region14: #{tpu_custom_call.1} parent=11 // pred_check_branch
          %237 = sbr.rel (%p235) target = $region16
        $region15: #{tpu_custom_call.1} parent=11 // pred_region
          %239 = vsyncadd [#allocation6], 0
          %s240 = sshll.u32 %s1, 4
          %s241 = int_to_ptr.hbm [resolvable:$true] %s240
          %s242 = sshll.u32 [#allocation5], 4
          %s243 = int_to_ptr.vmem [resolvable:$true] %s242
          %248 = dma.hbm_to_vmem [thread:$0]  %s241, 1024, %s243, [#allocation6], 512, 512, 32
        $region16: #{tpu_custom_call.1} parent=11 // pred_fallthru
          _
        // Predicated region
        $region17: #{tpu_custom_call.1} parent=11 // pred_check
          %p249 = pneg %p89
        $region18: #{tpu_custom_call.1} parent=11 // pred_check_branch
          %251 = sbr.rel (%p249) target = $region20
        $region19: #{tpu_custom_call.1} parent=11 // pred_region
          _
        $region20: #{tpu_custom_call.1} parent=11 // pred_fallthru
          _
        // Predicated region
        $region21: #{tpu_custom_call.1} parent=11 // pred_check
          %p252 = pneg %p110
        $region22: #{tpu_custom_call.1} parent=11 // pred_check_branch
          %254 = sbr.rel (%p252) target = $region24
        $region23: #{tpu_custom_call.1} parent=11 // pred_region
          _
        $region24: #{tpu_custom_call.1} parent=11 // pred_fallthru
          _
        // Predicated region
        $region25: #{tpu_custom_call.1} parent=11 // pred_check
          %p255 = pneg %p131
        $region26: #{tpu_custom_call.1} parent=11 // pred_check_branch
          %257 = sbr.rel (%p255) target = $region28
        $region27: #{tpu_custom_call.1} parent=11 // pred_region
          _
        $region28: #{tpu_custom_call.1} parent=11 // pred_fallthru
          _
        // Predicated region
        $region29: #{tpu_custom_call.1} parent=11 // pred_check
          %p258 = pneg %p152
        $region30: #{tpu_custom_call.1} parent=11 // pred_check_branch
          %260 = sbr.rel (%p258) target = $region32
        $region31: #{tpu_custom_call.1} parent=11 // pred_region
          _
        $region32: #{tpu_custom_call.1} parent=11 // pred_fallthru
          _
        // Predicated region
        $region33: #{tpu_custom_call.1} parent=11 // pred_check
          %p261 = pneg %p173
        $region34: #{tpu_custom_call.1} parent=11 // pred_check_branch
          %263 = sbr.rel (%p261) target = $region36
        $region35: #{tpu_custom_call.1} parent=11 // pred_region
          _
        $region36: #{tpu_custom_call.1} parent=11 // pred_fallthru
          _
        // Predicated region
        $region37: #{tpu_custom_call.1} parent=11 // pred_check
          %p264 = pneg %p194
        $region38: #{tpu_custom_call.1} parent=11 // pred_check_branch
          %266 = sbr.rel (%p264) target = $region40
        $region39: #{tpu_custom_call.1} parent=11 // pred_region
          _
        $region40: #{tpu_custom_call.1} parent=11 // pred_fallthru
          _
      $region12: #{tpu_custom_call.1} parent=5 // pred_fallthru
        _
      %p267 = scmp.lt.s32.totalorder %s21, 2
      // Predicated region
      $region41: #{tpu_custom_call.1} parent=5 // pred_check
        %p268 = pneg %p267
      $region42: #{tpu_custom_call.1} parent=5 // pred_check_branch
        %270 = sbr.rel (%p268) target = $region44
      $region43: #{tpu_custom_call.1} parent=5 // pred_region
        // Predicated region
        $region45: #{tpu_custom_call.1} parent=43 // pred_check
          %p271 = pneg %p41
        $region46: #{tpu_custom_call.1} parent=43 // pred_check_branch
          %273 = sbr.rel (%p271) target = $region48
        $region47: #{tpu_custom_call.1} parent=43 // pred_region
          %s274 = sand.u32 %s31, 1
          %s275 = scalar_lea.sflag [#allocation3], %s274
          %s276 = sand.u32 %s31, 1
          %s277 = smul.addr %s276, 64
          %s278 = scalar_lea.vmem [#allocation2], %s277
          %s279 = smul.u32 4, %s21
          %281 = vsyncadd %s275, 0
          %s282 = smul.addr %s279, 8
          %s283 = scalar_lea.hbm %s0, %s282
          %s284 = sshll.u32 %s283, 4
          %s285 = int_to_ptr.hbm [resolvable:$true] %s284
          %s286 = sshll.u32 %s278, 4
          %s287 = int_to_ptr.vmem [resolvable:$true] %s286
          %292 = dma.hbm_to_vmem [thread:$0]  %s285, 1024, %s287, %s275, 1024, 512, 32
        $region48: #{tpu_custom_call.1} parent=43 // pred_fallthru
          _
      $region44: #{tpu_custom_call.1} parent=5 // pred_fallthru
        _
      %p293 = scmp.le.s32.totalorder 1, %s21
      %p294 = scmp.lt.s32.totalorder %s21, 3
      %p295 = pnand %p293, %p294
      %p296 = pneg %p295
      // Predicated region
      $region49: #{tpu_custom_call.1} parent=5 // pred_check
        _
      $region50: #{tpu_custom_call.1} parent=5 // pred_check_branch
        %298 = sbr.rel (%p295) target = $region52
      $region51: #{tpu_custom_call.1} parent=5 // pred_region
        %s299 = ssub.s32 %s21, 1
        %s300 = sand.u32 %s34, 1
        %s301 = scalar_lea.sflag [#allocation3], %s300
        %s302 = sand.u32 %s34, 1
        %s303 = smul.addr %s302, 64
        %s304 = scalar_lea.vmem [#allocation2], %s303
        // Predicated region
        $region53: #{tpu_custom_call.1} parent=51 // pred_check
          %p305 = pneg %p47
        $region54: #{tpu_custom_call.1} parent=51 // pred_check_branch
          %307 = sbr.rel (%p305) target = $region56
        $region55: #{tpu_custom_call.1} parent=51 // pred_region
          %309 = dma.done %s301, 1024
        $region56: #{tpu_custom_call.1} parent=51 // pred_fallthru
          _
        // Predicated region
        $region57: #{tpu_custom_call.1} parent=51 // pred_check
          %p310 = pneg %p68
        $region58: #{tpu_custom_call.1} parent=51 // pred_check_branch
          %312 = sbr.rel (%p310) target = $region60
        $region59: #{tpu_custom_call.1} parent=51 // pred_region
          %314 = dma.done [#allocation6], 1024
        $region60: #{tpu_custom_call.1} parent=51 // pred_fallthru
          _
        %s315 = sand.u32 %s34, 1
        %s316 = scalar_lea.sflag [#allocation3], %s315
        %s317 = sand.u32 %s34, 1
        %s318 = smul.addr %s317, 64
        %s319 = scalar_lea.vmem [#allocation2], %s318
        %p320 = pneg %p47
        %p321 = pneg %p44
        %p322 = pneg %p68
        %p323 = pneg %p65
        %p324 = pneg %p89
        %p325 = pneg %p86
        %p326 = pneg %p110
        %p327 = pneg %p107
        %p328 = pneg %p131
        %p329 = pneg %p128
        %p330 = pneg %p152
        %p331 = pneg %p149
        %p332 = pneg %p173
        %p333 = pneg %p170
        %p334 = pneg %p194
        %p335 = pneg %p191
        %p336 = pneg %p220
        %p337 = pneg %p217
        %s338 = sand.u32 %s207, 1
        %s339 = scalar_lea.sflag [#allocation4], %s338
        %s340 = sand.u32 %s207, 1
        %s341 = smul.addr %s340, 64
        %s342 = scalar_lea.vmem [#allocation7], %s341
        %s343 = smul.u32 4, %s26
        %s344 = smul.u32 4, %s26
        %v345 = vld [vmem:[%s304] sm:$0xff]
        %v346 = vld [vmem:[%s304 + $0x8] sm:$0xff]
        %v347 = vld [vmem:[%s304 + $0x10] sm:$0xff]
        %v348 = vld [vmem:[%s304 + $0x18] sm:$0xff]
        %v349 = vld [vmem:[%s304 + $0x20] sm:$0xf]
        %v350 = vld [vmem:[%s304 + $0x28] sm:$0xf]
        %v351 = vld [vmem:[%s304 + $0x30] sm:$0xf]
        %v352 = vld [vmem:[%s304 + $0x38] sm:$0xf]
        %v353 = vld [vmem:[%s2] sm:$0xff]
        %v354 = vmax.f32 %v345, 0.0
        %v355 = vmax.f32 %v346, 0.0
        %v356 = vmax.f32 %v347, 0.0
        %v357 = vmax.f32 %v348, 0.0
        %v358 = vmax.f32 %v349, 0.0
        %v359 = vmax.f32 %v350, 0.0
        %v360 = vmax.f32 %v351, 0.0
        %v361 = vmax.f32 %v352, 0.0
        %v362 = vld [vmem:[%s3] sm:$0xff]
        %364 = vset.pattern.permute.xlu0 0
        %365 = vperm.xlu0 %364, %v362
        %v366 = vpop.permute.xlu0 %365
        %vm368 = vcmask 97280
        %v370 = vsel %vm368, %v353, 0
        %vm372 = vcmask 1043456
        %v374 = vsel %vm372, %v358, 0
        %v377 = vsel %vm372, %v359, 0
        %v380 = vsel %vm372, %v360, 0
        %v383 = vsel %vm372, %v361, 0
        %385 = vmatpush.msra.mxu0 0.0
        %386 = vmatpush.msra.mxu0 0.0
        %387 = vmatpush.msra.mxu0 0.0
        %388 = vmatpush.msra.mxu0 0.0
        %389 = vmatpush.msra.mxu0 0.0
        %390 = vmatpush.msra.mxu0 0.0
        %391 = vmatpush.msra.mxu0 0.0
        %392 = vmatpush.msra.mxu0 0.0
        %393 = vmatpush.msra.mxu0 0.0
        %394 = vmatpush.msra.mxu0 0.0
        %395 = vmatpush.msra.mxu0 0.0
        %396 = vmatpush.msra.mxu0 0.0
        %397 = vmatpush.msra.mxu0 0.0
        %398 = vmatpush.msra.mxu0 0.0
        %399 = vmatpush.msra.mxu0 %v374
        %400 = vmatpush.msra.mxu0 %v354
        %401 = vmatmul.f32.gmra.mxu0 %v370
        %v402 = vpop.f32.mrf.mxu0
        %v403 = vadd.f32 %v366, %v402
        %404 = vdwg.mxu0
        %405 = vmatpush.msra.mxu0 0.0
        %406 = vmatpush.msra.mxu0 0.0
        %407 = vmatpush.msra.mxu0 0.0
        %408 = vmatpush.msra.mxu0 0.0
        %409 = vmatpush.msra.mxu0 0.0
        %410 = vmatpush.msra.mxu0 0.0
        %411 = vmatpush.msra.mxu0 0.0
        %412 = vmatpush.msra.mxu0 0.0
        %413 = vmatpush.msra.mxu0 0.0
        %414 = vmatpush.msra.mxu0 0.0
        %415 = vmatpush.msra.mxu0 0.0
        %416 = vmatpush.msra.mxu0 0.0
        %417 = vmatpush.msra.mxu0 0.0
        %418 = vmatpush.msra.mxu0 0.0
        %419 = vmatpush.msra.mxu0 %v377
        %420 = vmatpush.msra.mxu0 %v355
        %421 = vmatmul.f32.gmra.mxu0 %v370
        %v422 = vpop.f32.mrf.mxu0
        %v423 = vadd.f32 %v366, %v422
        %424 = vdwg.mxu0
        %425 = vmatpush.msra.mxu0 0.0
        %426 = vmatpush.msra.mxu0 0.0
        %427 = vmatpush.msra.mxu0 0.0
        %428 = vmatpush.msra.mxu0 0.0
        %429 = vmatpush.msra.mxu0 0.0
        %430 = vmatpush.msra.mxu0 0.0
        %431 = vmatpush.msra.mxu0 0.0
        %432 = vmatpush.msra.mxu0 0.0
        %433 = vmatpush.msra.mxu0 0.0
        %434 = vmatpush.msra.mxu0 0.0
        %435 = vmatpush.msra.mxu0 0.0
        %436 = vmatpush.msra.mxu0 0.0
        %437 = vmatpush.msra.mxu0 0.0
        %438 = vmatpush.msra.mxu0 0.0
        %439 = vmatpush.msra.mxu0 %v380
        %440 = vmatpush.msra.mxu0 %v356
        %441 = vmatmul.f32.gmra.mxu0 %v370
        %v442 = vpop.f32.mrf.mxu0
        %v443 = vadd.f32 %v366, %v442
        %444 = vdwg.mxu0
        %445 = vmatpush.msra.mxu0 0.0
        %446 = vmatpush.msra.mxu0 0.0
        %447 = vmatpush.msra.mxu0 0.0
        %448 = vmatpush.msra.mxu0 0.0
        %449 = vmatpush.msra.mxu0 0.0
        %450 = vmatpush.msra.mxu0 0.0
        %451 = vmatpush.msra.mxu0 0.0
        %452 = vmatpush.msra.mxu0 0.0
        %453 = vmatpush.msra.mxu0 0.0
        %454 = vmatpush.msra.mxu0 0.0
        %455 = vmatpush.msra.mxu0 0.0
        %456 = vmatpush.msra.mxu0 0.0
        %457 = vmatpush.msra.mxu0 0.0
        %458 = vmatpush.msra.mxu0 0.0
        %459 = vmatpush.msra.mxu0 %v383
        %460 = vmatpush.msra.mxu0 %v357
        %461 = vmatmul.f32.gmra.mxu0 %v370
        %v462 = vpop.f32.mrf.mxu0
        %v463 = vadd.f32 %v366, %v462
        %464 = vdwg.mxu0
        %v465 = vmax.f32 %v403, 0.0
        %v466 = vmax.f32 %v423, 0.0
        %v467 = vmax.f32 %v443, 0.0
        %v468 = vmax.f32 %v463, 0.0
        %469 = vrot.lane.b32.xlu0 %v465, 17
        %v470 = vpop.permute.xlu0 %469
        %471 = vrot.lane.b32.xlu0 %v466, 17
        %v472 = vpop.permute.xlu0 %471
        %473 = vrot.lane.b32.xlu0 %v467, 17
        %v474 = vpop.permute.xlu0 %473
        %475 = vrot.lane.b32.xlu0 %v468, 17
        %v476 = vpop.permute.xlu0 %475
        %v477 = vlaneseq
        %v478 = vand.u32 %v477, 127
        %vm479 = vcmp.lt.s32.totalorder %v478, 17
        %v480 = vsel %vm479, %v474, %v476
        %v481 = vsel %vm479, %v472, %v474
        %v482 = vsel %vm479, %v470, %v472
        %v483 = vsel %vm479, %v476, %v470
        %v484 = vld [vmem:[#allocation5] ss:$8 sm:$0xf]
        %v486 = vperm.slane %v484, 0
        %v487 = vperm.slane %v484, 1
        %v488 = vperm.slane %v484, 2
        %v489 = vperm.slane %v484, 3
        %v494 = vmul.f32 %v483, %v486
        %v495 = vmul.f32 %v482, %v487
        %v496 = vmul.f32 %v481, %v488
        %v497 = vmul.f32 %v480, %v489
        %498 = vrot.lane.b32.xlu0 %v465, 16
        %v499 = vpop.permute.xlu0 %498
        %500 = vrot.lane.b32.xlu0 %v466, 16
        %v501 = vpop.permute.xlu0 %500
        %502 = vrot.lane.b32.xlu0 %v467, 16
        %v503 = vpop.permute.xlu0 %502
        %504 = vrot.lane.b32.xlu0 %v468, 16
        %v505 = vpop.permute.xlu0 %504
        %vm506 = vcmp.lt.s32.totalorder %v478, 16
        %v507 = vsel %vm506, %v503, %v505
        %v508 = vsel %vm506, %v501, %v503
        %v509 = vsel %vm506, %v499, %v501
        %v510 = vsel %vm506, %v505, %v499
        %s511 = scalar_lea.vmem [#allocation5], 1
        %v512 = vld [vmem:[%s511] ss:$8 sm:$0xf]
        %v514 = vperm.slane %v512, 0
        %v515 = vperm.slane %v512, 1
        %v516 = vperm.slane %v512, 2
        %v517 = vperm.slane %v512, 3
        %v522 = vmul.f32 %v510, %v514
        %v523 = vmul.f32 %v509, %v515
        %v524 = vmul.f32 %v508, %v516
        %v525 = vmul.f32 %v507, %v517
        %526 = vrot.lane.b32.xlu0 %v465, 15
        %v527 = vpop.permute.xlu0 %526
        %528 = vrot.lane.b32.xlu0 %v466, 15
        %v529 = vpop.permute.xlu0 %528
        %530 = vrot.lane.b32.xlu0 %v467, 15
        %v531 = vpop.permute.xlu0 %530
        %532 = vrot.lane.b32.xlu0 %v468, 15
        %v533 = vpop.permute.xlu0 %532
        %vm534 = vcmp.lt.s32.totalorder %v478, 15
        %v535 = vsel %vm534, %v531, %v533
        %v536 = vsel %vm534, %v529, %v531
        %v537 = vsel %vm534, %v527, %v529
        %v538 = vsel %vm534, %v533, %v527
        %s539 = scalar_lea.vmem [#allocation5], 2
        %v540 = vld [vmem:[%s539] ss:$8 sm:$0xf]
        %v542 = vperm.slane %v540, 0
        %v543 = vperm.slane %v540, 1
        %v544 = vperm.slane %v540, 2
        %v545 = vperm.slane %v540, 3
        %v550 = vmul.f32 %v538, %v542
        %v551 = vmul.f32 %v537, %v543
        %v552 = vmul.f32 %v536, %v544
        %v553 = vmul.f32 %v535, %v545
        %554 = vrot.lane.b32.xlu0 %v465, 1
        %v555 = vpop.permute.xlu0 %554
        %556 = vrot.lane.b32.xlu0 %v466, 1
        %v557 = vpop.permute.xlu0 %556
        %558 = vrot.lane.b32.xlu0 %v467, 1
        %v559 = vpop.permute.xlu0 %558
        %560 = vrot.lane.b32.xlu0 %v468, 1
        %v561 = vpop.permute.xlu0 %560
        %vm562 = vcmp.lt.s32.totalorder %v478, 1
        %v563 = vsel %vm562, %v559, %v561
        %v564 = vsel %vm562, %v557, %v559
        %v565 = vsel %vm562, %v555, %v557
        %v566 = vsel %vm562, %v561, %v555
        %s567 = scalar_lea.vmem [#allocation5], 3
        %v568 = vld [vmem:[%s567] ss:$8 sm:$0xf]
        %v570 = vperm.slane %v568, 0
        %v571 = vperm.slane %v568, 1
        %v572 = vperm.slane %v568, 2
        %v573 = vperm.slane %v568, 3
        %v578 = vmul.f32 %v566, %v570
        %v579 = vmul.f32 %v565, %v571
        %v580 = vmul.f32 %v564, %v572
        %v581 = vmul.f32 %v563, %v573
        %s582 = scalar_lea.vmem [#allocation5], 4
        %v583 = vld [vmem:[%s582] ss:$8 sm:$0xf]
        %v585 = vperm.slane %v583, 0
        %v586 = vperm.slane %v583, 1
        %v587 = vperm.slane %v583, 2
        %v588 = vperm.slane %v583, 3
        %v593 = vmul.f32 %v465, %v585
        %v594 = vmul.f32 %v466, %v586
        %v595 = vmul.f32 %v467, %v587
        %v596 = vmul.f32 %v468, %v588
        %597 = vrot.lane.b32.xlu0 %v465, 127
        %v598 = vpop.permute.xlu0 %597
        %599 = vrot.lane.b32.xlu0 %v466, 127
        %v600 = vpop.permute.xlu0 %599
        %601 = vrot.lane.b32.xlu0 %v467, 127
        %v602 = vpop.permute.xlu0 %601
        %603 = vrot.lane.b32.xlu0 %v468, 127
        %v604 = vpop.permute.xlu0 %603
        %vm605 = vcmp.lt.s32.totalorder %v478, 127
        %v606 = vsel %vm605, %v602, %v604
        %v607 = vsel %vm605, %v600, %v602
        %v608 = vsel %vm605, %v598, %v600
        %v609 = vsel %vm605, %v604, %v598
        %s610 = scalar_lea.vmem [#allocation5], 5
        %v611 = vld [vmem:[%s610] ss:$8 sm:$0xf]
        %v613 = vperm.slane %v611, 0
        %v614 = vperm.slane %v611, 1
        %v615 = vperm.slane %v611, 2
        %v616 = vperm.slane %v611, 3
        %v621 = vmul.f32 %v608, %v613
        %v622 = vmul.f32 %v607, %v614
        %v623 = vmul.f32 %v606, %v615
        %v624 = vmul.f32 %v609, %v616
        %625 = vrot.lane.b32.xlu0 %v465, 113
        %v626 = vpop.permute.xlu0 %625
        %627 = vrot.lane.b32.xlu0 %v466, 113
        %v628 = vpop.permute.xlu0 %627
        %629 = vrot.lane.b32.xlu0 %v467, 113
        %v630 = vpop.permute.xlu0 %629
        %631 = vrot.lane.b32.xlu0 %v468, 113
        %v632 = vpop.permute.xlu0 %631
        %vm633 = vcmp.lt.s32.totalorder %v478, 113
        %v634 = vsel %vm633, %v630, %v632
        %v635 = vsel %vm633, %v628, %v630
        %v636 = vsel %vm633, %v626, %v628
        %v637 = vsel %vm633, %v632, %v626
        %s638 = scalar_lea.vmem [#allocation5], 6
        %v639 = vld [vmem:[%s638] ss:$8 sm:$0xf]
        %v641 = vperm.slane %v639, 0
        %v642 = vperm.slane %v639, 1
        %v643 = vperm.slane %v639, 2
        %v644 = vperm.slane %v639, 3
        %v649 = vmul.f32 %v636, %v641
        %v650 = vmul.f32 %v635, %v642
        %v651 = vmul.f32 %v634, %v643
        %v652 = vmul.f32 %v637, %v644
        %653 = vrot.lane.b32.xlu0 %v465, 112
        %v654 = vpop.permute.xlu0 %653
        %655 = vrot.lane.b32.xlu0 %v466, 112
        %v656 = vpop.permute.xlu0 %655
        %657 = vrot.lane.b32.xlu0 %v467, 112
        %v658 = vpop.permute.xlu0 %657
        %659 = vrot.lane.b32.xlu0 %v468, 112
        %v660 = vpop.permute.xlu0 %659
        %vm661 = vcmp.lt.s32.totalorder %v478, 112
        %v662 = vsel %vm661, %v658, %v660
        %v663 = vsel %vm661, %v656, %v658
        %v664 = vsel %vm661, %v654, %v656
        %v665 = vsel %vm661, %v660, %v654
        %s666 = scalar_lea.vmem [#allocation5], 7
        %v667 = vld [vmem:[%s666] ss:$8 sm:$0xf]
        %v669 = vperm.slane %v667, 0
        %v670 = vperm.slane %v667, 1
        %v671 = vperm.slane %v667, 2
        %v672 = vperm.slane %v667, 3
        %v677 = vmul.f32 %v664, %v669
        %v678 = vmul.f32 %v663, %v670
        %v679 = vmul.f32 %v662, %v671
        %v680 = vmul.f32 %v665, %v672
        %681 = vrot.lane.b32.xlu0 %v465, 111
        %v682 = vpop.permute.xlu0 %681
        %683 = vrot.lane.b32.xlu0 %v466, 111
        %v684 = vpop.permute.xlu0 %683
        %685 = vrot.lane.b32.xlu0 %v467, 111
        %v686 = vpop.permute.xlu0 %685
        %687 = vrot.lane.b32.xlu0 %v468, 111
        %v688 = vpop.permute.xlu0 %687
        %vm689 = vcmp.lt.s32.totalorder %v478, 111
        %v690 = vsel %vm689, %v686, %v688
        %v691 = vsel %vm689, %v684, %v686
        %v692 = vsel %vm689, %v682, %v684
        %v693 = vsel %vm689, %v688, %v682
        %s694 = scalar_lea.vmem [#allocation5], 32
        %v695 = vld [vmem:[%s694] ss:$8 sm:$0xf]
        %v697 = vperm.slane %v695, 0
        %v698 = vperm.slane %v695, 1
        %v699 = vperm.slane %v695, 2
        %v700 = vperm.slane %v695, 3
        %v705 = vmul.f32 %v692, %v697
        %v706 = vmul.f32 %v691, %v698
        %v707 = vmul.f32 %v690, %v699
        %v708 = vmul.f32 %v693, %v700
        %v709 = vld [vmem:[%s4] sm:$0xff]
        %v710 = vld [vmem:[%s5] sm:$0xff]
        %712 = vset.pattern.permute.xlu0 0
        %713 = vperm.xlu0 %712, %v710
        %v714 = vpop.permute.xlu0 %713
        %vm716 = vcmask 588800
        %v718 = vsel %vm716, %v709, 0
        %720 = vmatpush.msra.mxu0 0.0
        %721 = vmatpush.msra.mxu0 0.0
        %722 = vmatpush.msra.mxu0 0.0
        %723 = vmatpush.msra.mxu0 0.0
        %724 = vmatpush.msra.mxu0 0.0
        %725 = vmatpush.msra.mxu0 0.0
        %726 = vmatpush.msra.mxu0 0.0
        %727 = vmatpush.msra.mxu0 %v705
        %728 = vmatpush.msra.mxu0 %v677
        %729 = vmatpush.msra.mxu0 %v649
        %730 = vmatpush.msra.mxu0 %v621
        %731 = vmatpush.msra.mxu0 %v593
        %732 = vmatpush.msra.mxu0 %v578
        %733 = vmatpush.msra.mxu0 %v550
        %734 = vmatpush.msra.mxu0 %v522
        %735 = vmatpush.msra.mxu0 %v494
        %736 = vmatmul.f32.gmra.mxu0 %v718
        %v737 = vpop.f32.mrf.mxu0
        %v738 = vadd.f32 %v714, %v737
        %739 = vdwg.mxu0
        %740 = vmatpush.msra.mxu0 0.0
        %741 = vmatpush.msra.mxu0 0.0
        %742 = vmatpush.msra.mxu0 0.0
        %743 = vmatpush.msra.mxu0 0.0
        %744 = vmatpush.msra.mxu0 0.0
        %745 = vmatpush.msra.mxu0 0.0
        %746 = vmatpush.msra.mxu0 0.0
        %747 = vmatpush.msra.mxu0 %v706
        %748 = vmatpush.msra.mxu0 %v678
        %749 = vmatpush.msra.mxu0 %v650
        %750 = vmatpush.msra.mxu0 %v622
        %751 = vmatpush.msra.mxu0 %v594
        %752 = vmatpush.msra.mxu0 %v579
        %753 = vmatpush.msra.mxu0 %v551
        %754 = vmatpush.msra.mxu0 %v523
        %755 = vmatpush.msra.mxu0 %v495
        %756 = vmatmul.f32.gmra.mxu0 %v718
        %v757 = vpop.f32.mrf.mxu0
        %v758 = vadd.f32 %v714, %v757
        %759 = vdwg.mxu0
        %760 = vmatpush.msra.mxu0 0.0
        %761 = vmatpush.msra.mxu0 0.0
        %762 = vmatpush.msra.mxu0 0.0
        %763 = vmatpush.msra.mxu0 0.0
        %764 = vmatpush.msra.mxu0 0.0
        %765 = vmatpush.msra.mxu0 0.0
        %766 = vmatpush.msra.mxu0 0.0
        %767 = vmatpush.msra.mxu0 %v707
        %768 = vmatpush.msra.mxu0 %v679
        %769 = vmatpush.msra.mxu0 %v651
        %770 = vmatpush.msra.mxu0 %v623
        %771 = vmatpush.msra.mxu0 %v595
        %772 = vmatpush.msra.mxu0 %v580
        %773 = vmatpush.msra.mxu0 %v552
        %774 = vmatpush.msra.mxu0 %v524
        %775 = vmatpush.msra.mxu0 %v496
        %776 = vmatmul.f32.gmra.mxu0 %v718
        %v777 = vpop.f32.mrf.mxu0
        %v778 = vadd.f32 %v714, %v777
        %779 = vdwg.mxu0
        %780 = vmatpush.msra.mxu0 0.0
        %781 = vmatpush.msra.mxu0 0.0
        %782 = vmatpush.msra.mxu0 0.0
        %783 = vmatpush.msra.mxu0 0.0
        %784 = vmatpush.msra.mxu0 0.0
        %785 = vmatpush.msra.mxu0 0.0
        %786 = vmatpush.msra.mxu0 0.0
        %787 = vmatpush.msra.mxu0 %v708
        %788 = vmatpush.msra.mxu0 %v680
        %789 = vmatpush.msra.mxu0 %v652
        %790 = vmatpush.msra.mxu0 %v624
        %791 = vmatpush.msra.mxu0 %v596
        %792 = vmatpush.msra.mxu0 %v581
        %793 = vmatpush.msra.mxu0 %v553
        %794 = vmatpush.msra.mxu0 %v525
        %795 = vmatpush.msra.mxu0 %v497
        %796 = vmatmul.f32.gmra.mxu0 %v718
        %v797 = vpop.f32.mrf.mxu0
        %v798 = vadd.f32 %v714, %v797
        %799 = vdwg.mxu0
        %v800 = vmax.f32 %v738, 0.0
        %v801 = vmax.f32 %v758, 0.0
        %v802 = vmax.f32 %v778, 0.0
        %v803 = vmax.f32 %v798, 0.0
        %v804 = vld [vmem:[%s6] sm:$0xff]
        %v805 = vld [vmem:[%s6 + $0x8] sm:$0xf]
        %v806 = vld [vmem:[%s7] sm:$0xff]
        %v807 = vld [vmem:[%s7 + $0x8] sm:$0xf]
        %809 = vset.pattern.permute.xlu0 0
        %810 = vperm.xlu0 %809, %v806
        %v811 = vpop.permute.xlu0 %810
        %814 = vset.pattern.permute.xlu0 0
        %815 = vperm.xlu0 %814, %v807
        %v816 = vpop.permute.xlu0 %815
        %vm818 = vcmask 64512
        %v820 = vsel %vm818, %v804, 0
        %v823 = vsel %vm818, %v805, 0
        %825 = vmatpush.msra.mxu0 0.0
        %826 = vmatpush.msra.mxu0 0.0
        %827 = vmatpush.msra.mxu0 0.0
        %828 = vmatpush.msra.mxu0 0.0
        %829 = vmatpush.msra.mxu0 0.0
        %830 = vmatpush.msra.mxu0 0.0
        %831 = vmatpush.msra.mxu0 0.0
        %832 = vmatpush.msra.mxu0 0.0
        %833 = vmatpush.msra.mxu0 0.0
        %834 = vmatpush.msra.mxu0 0.0
        %835 = vmatpush.msra.mxu0 0.0
        %836 = vmatpush.msra.mxu0 0.0
        %837 = vmatpush.msra.mxu0 0.0
        %838 = vmatpush.msra.mxu0 0.0
        %839 = vmatpush.msra.mxu0 0.0
        %840 = vmatpush.msra.mxu0 %v800
        %841 = vmatmul.f32.gmra.mxu0 %v820
        %v842 = vpop.f32.mrf.mxu0
        %v843 = vadd.f32 %v811, %v842
        %844 = vmatmul.f32.gmra.mxu0 %v823
        %v845 = vpop.f32.mrf.mxu0
        %v846 = vadd.f32 %v816, %v845
        %847 = vdwg.mxu0
        %848 = vmatpush.msra.mxu0 0.0
        %849 = vmatpush.msra.mxu0 0.0
        %850 = vmatpush.msra.mxu0 0.0
        %851 = vmatpush.msra.mxu0 0.0
        %852 = vmatpush.msra.mxu0 0.0
        %853 = vmatpush.msra.mxu0 0.0
        %854 = vmatpush.msra.mxu0 0.0
        %855 = vmatpush.msra.mxu0 0.0
        %856 = vmatpush.msra.mxu0 0.0
        %857 = vmatpush.msra.mxu0 0.0
        %858 = vmatpush.msra.mxu0 0.0
        %859 = vmatpush.msra.mxu0 0.0
        %860 = vmatpush.msra.mxu0 0.0
        %861 = vmatpush.msra.mxu0 0.0
        %862 = vmatpush.msra.mxu0 0.0
        %863 = vmatpush.msra.mxu0 %v801
        %864 = vmatmul.f32.gmra.mxu0 %v820
        %v865 = vpop.f32.mrf.mxu0
        %v866 = vadd.f32 %v811, %v865
        %867 = vmatmul.f32.gmra.mxu0 %v823
        %v868 = vpop.f32.mrf.mxu0
        %v869 = vadd.f32 %v816, %v868
        %870 = vdwg.mxu0
        %871 = vmatpush.msra.mxu0 0.0
        %872 = vmatpush.msra.mxu0 0.0
        %873 = vmatpush.msra.mxu0 0.0
        %874 = vmatpush.msra.mxu0 0.0
        %875 = vmatpush.msra.mxu0 0.0
        %876 = vmatpush.msra.mxu0 0.0
        %877 = vmatpush.msra.mxu0 0.0
        %878 = vmatpush.msra.mxu0 0.0
        %879 = vmatpush.msra.mxu0 0.0
        %880 = vmatpush.msra.mxu0 0.0
        %881 = vmatpush.msra.mxu0 0.0
        %882 = vmatpush.msra.mxu0 0.0
        %883 = vmatpush.msra.mxu0 0.0
        %884 = vmatpush.msra.mxu0 0.0
        %885 = vmatpush.msra.mxu0 0.0
        %886 = vmatpush.msra.mxu0 %v802
        %887 = vmatmul.f32.gmra.mxu0 %v820
        %v888 = vpop.f32.mrf.mxu0
        %v889 = vadd.f32 %v811, %v888
        %890 = vmatmul.f32.gmra.mxu0 %v823
        %v891 = vpop.f32.mrf.mxu0
        %v892 = vadd.f32 %v816, %v891
        %893 = vdwg.mxu0
        %894 = vmatpush.msra.mxu0 0.0
        %895 = vmatpush.msra.mxu0 0.0
        %896 = vmatpush.msra.mxu0 0.0
        %897 = vmatpush.msra.mxu0 0.0
        %898 = vmatpush.msra.mxu0 0.0
        %899 = vmatpush.msra.mxu0 0.0
        %900 = vmatpush.msra.mxu0 0.0
        %901 = vmatpush.msra.mxu0 0.0
        %902 = vmatpush.msra.mxu0 0.0
        %903 = vmatpush.msra.mxu0 0.0
        %904 = vmatpush.msra.mxu0 0.0
        %905 = vmatpush.msra.mxu0 0.0
        %906 = vmatpush.msra.mxu0 0.0
        %907 = vmatpush.msra.mxu0 0.0
        %908 = vmatpush.msra.mxu0 0.0
        %909 = vmatpush.msra.mxu0 %v803
        %910 = vmatmul.f32.gmra.mxu0 %v820
        %v911 = vpop.f32.mrf.mxu0
        %v912 = vadd.f32 %v811, %v911
        %913 = vmatmul.f32.gmra.mxu0 %v823
        %v914 = vpop.f32.mrf.mxu0
        %v915 = vadd.f32 %v816, %v914
        %916 = vdwg.mxu0
        %v917 = vadd.f32 %v843, %v345
        %v918 = vadd.f32 %v866, %v346
        %v919 = vadd.f32 %v889, %v347
        %v920 = vadd.f32 %v912, %v348
        %v921 = vadd.f32 %v846, %v349
        %v922 = vadd.f32 %v869, %v350
        %v923 = vadd.f32 %v892, %v351
        %v924 = vadd.f32 %v915, %v352
        %925 = vst [vmem:[%s342] sm:$0xff] %v917
        %926 = vst [vmem:[%s342 + $0x8] sm:$0xff] %v918
        %927 = vst [vmem:[%s342 + $0x10] sm:$0xff] %v919
        %928 = vst [vmem:[%s342 + $0x18] sm:$0xff] %v920
        %929 = vst [vmem:[%s342 + $0x20] sm:$0xf] %v921
        %930 = vst [vmem:[%s342 + $0x28] sm:$0xf] %v922
        %931 = vst [vmem:[%s342 + $0x30] sm:$0xf] %v923
        %932 = vst [vmem:[%s342 + $0x38] sm:$0xf] %v924
        %s933 = sand.u32 %s207, 1
        %s934 = scalar_lea.sflag [#allocation4], %s933
        %s935 = sand.u32 %s207, 1
        %s936 = smul.addr %s935, 64
        %s937 = scalar_lea.vmem [#allocation7], %s936
        // Predicated region
        $region61: #{tpu_custom_call.1} parent=51 // pred_check
          %p938 = pneg %p217
        $region62: #{tpu_custom_call.1} parent=51 // pred_check_branch
          %940 = sbr.rel (%p938) target = $region64
        $region63: #{tpu_custom_call.1} parent=51 // pred_region
          %s941 = smul.u32 4, %s26
          %943 = vsyncadd %s934, 0
          %s944 = smul.addr %s941, 8
          %s945 = scalar_lea.hbm %s8, %s944
          %s946 = sshll.u32 %s937, 4
          %s947 = int_to_ptr.vmem [resolvable:$true] %s946
          %s948 = sshll.u32 %s945, 4
          %s949 = int_to_ptr.hbm [resolvable:$true] %s948
          %954 = dma.vmem_to_hbm [thread:$0]  %s947, 1024, %s949, %s934, 512, 1024, 32
        $region64: #{tpu_custom_call.1} parent=51 // pred_fallthru
          _
      $region52: #{tpu_custom_call.1} parent=5 // pred_fallthru
        _
      %p955 = scmp.le.s32.totalorder 2, %s21
      // Predicated region
      $region65: #{tpu_custom_call.1} parent=5 // pred_check
        %p956 = pneg %p955
      $region66: #{tpu_custom_call.1} parent=5 // pred_check_branch
        %958 = sbr.rel (%p956) target = $region68
      $region67: #{tpu_custom_call.1} parent=5 // pred_region
        %s959 = ssub.s32 %s21, 2
        // Predicated region
        $region69: #{tpu_custom_call.1} parent=67 // pred_check
          %p960 = pneg %p223
        $region70: #{tpu_custom_call.1} parent=67 // pred_check_branch
          %962 = sbr.rel (%p960) target = $region72
        $region71: #{tpu_custom_call.1} parent=67 // pred_region
          %s963 = sand.u32 %s208, 1
          %s964 = scalar_lea.sflag [#allocation4], %s963
          %s965 = sand.u32 %s208, 1
          %s966 = smul.addr %s965, 64
          %s967 = scalar_lea.vmem [#allocation7], %s966
          %969 = dma.done %s964, 1024
        $region72: #{tpu_custom_call.1} parent=67 // pred_fallthru
          _
      $region68: #{tpu_custom_call.1} parent=5 // pred_fallthru
        _
    $region6: #{tpu_custom_call.1} parent=1 // loop_footer
      %s25 = sadd.s32 1, %s21
    $region7: #{tpu_custom_call.1} parent=1 // loop_footer_branch
      %20 = sbr.rel target = $region3
    $region8: #{tpu_custom_call.1} parent=1 // loop_exit
      _
    %970 = vsyncpa [#allocation3], 1
    %s971 = scalar_lea.sflag [#allocation3], 1
    %972 = vsyncpa %s971, 1
    %973 = vsyncpa [#allocation6], 1
    %974 = vsyncpa [#allocation4], 1
    %s975 = scalar_lea.sflag [#allocation4], 1
    %976 = vsyncpa %s975, 1

</llo_original>
